<compile_context>
chip_gen: v6e
topology: v6e:2x2x1
jax: 0.10.0
libtpu: 0.0.40
codegen_flags: <defaults>
</compile_context>

<pallas_src>
import jax
import jax.numpy as jnp
from jax.experimental import pallas as pl
from jax.experimental.pallas import tpu as pltpu

_LANES = 128          # vreg lane width (last dim)
_MAX_TILE_ROWS = 512  # ~85% of HBM roofline for mem-bound elementwise on v6e;
                      # 512x128 f32 tile = 256 KiB -> comfortably fits v7x's
                      # 64 MiB VMEM even with double-buffered in+out tiles.


def _debugnet5_kernel(w_ref, x_ref, o_ref):
    # w_ref: SMEM (3,) f32 scalar conv weights (each 1x1x1x1 conv == scalar mul)
    # x_ref/o_ref: VMEM (tile_rows, 128) lane-dense tiles
    x = x_ref[...]
    dt = x.dtype
    w1 = w_ref[0].astype(dt)
    w2 = w_ref[1].astype(dt)
    w3 = w_ref[2].astype(dt)
    zero = jnp.zeros((), dt)
    x = jnp.maximum(x * w1, zero)   # conv1 (1x1, no bias) + ReLU
    x = jnp.maximum(x * w2, zero)   # conv2 (1x1, no bias) + ReLU
    x = jnp.maximum(x * w3, zero)   # conv3 (1x1, no bias) + ReLU
    o_ref[...] = x


def debugnet5_forward(x, w1, w2, w3):
    """x: (N, 1, H, W). Returns (N*1*H*W, 1), matching x.view(-1, 1)."""
    N, C, H, W = x.shape
    assert C == 1, "DebugNet5 convs are 1->1 channel"
    total = N * C * H * W
    dtype = x.dtype

    # Lane-dense view: flatten (row-major, matches torch .view) and reshape to
    # (rows, 128), padding the tail so the block shape divides evenly.
    rows = pl.cdiv(total, _LANES)
    if rows >= _MAX_TILE_ROWS:
        tile_rows = _MAX_TILE_ROWS
    else:
        # single tile: round rows up to a sublane multiple (8)
        tile_rows = max(8, ((rows + 7) // 8) * 8)
    padded_rows = pl.cdiv(rows, tile_rows) * tile_rows
    padded_total = padded_rows * _LANES

    flat = x.reshape(-1)
    if padded_total != total:
        flat = jnp.pad(flat, (0, padded_total - total))
    x2d = flat.reshape(padded_rows, _LANES)

    # Conv weights are (1,1,1,1); keep them as f32 scalars in SMEM (32-bit
    # scalar path) and cast inside the kernel.
    w = jnp.stack(
        [w1.reshape(()), w2.reshape(()), w3.reshape(())]
    ).astype(jnp.float32)

    grid = (padded_rows // tile_rows,)
    bytes_per_elem = jnp.dtype(dtype).itemsize

    out2d = pl.pallas_call(
        _debugnet5_kernel,
        out_shape=jax.ShapeDtypeStruct((padded_rows, _LANES), dtype),
        grid=grid,
        in_specs=[
            # scalar weights: whole array in SMEM every grid step
            pl.BlockSpec(memory_space=pltpu.MemorySpace.SMEM),
            # lane-dense row tiles
            pl.BlockSpec((tile_rows, _LANES), lambda i: (i, 0)),
        ],
        out_specs=pl.BlockSpec((tile_rows, _LANES), lambda i: (i, 0)),
        compiler_params=pltpu.CompilerParams(
            dimension_semantics=("parallel",),
        ),
        cost_estimate=pl.CostEstimate(
            flops=6 * total,              # 3 muls + 3 maxes per element
            transcendentals=0,
            bytes_accessed=2 * bytes_per_elem * total,
        ),
    )(w, x2d)

    return out2d.reshape(-1)[:total].reshape(-1, 1)


if __name__ == "__main__":
    key = jax.random.PRNGKey(0)
    # Small shapes consistent with the module: batch=2, 1 channel, 16x16 spatial.
    x = jax.random.normal(key, (2, 1, 16, 16), dtype=jnp.float32)

    # Deterministic parameter init matching the module's __init__ (weights = 1.0).
    w1 = jnp.ones((1, 1, 1, 1), dtype=jnp.float32)
    w2 = jnp.ones((1, 1, 1, 1), dtype=jnp.float32)
    w3 = jnp.ones((1, 1, 1, 1), dtype=jnp.float32)

    out = debugnet5_forward(x, w1, w2, w3)
    out = jax.block_until_ready(out)

    # Reference check (pure JAX): relu(relu(relu(x*1)*1)*1).view(-1, 1)
    ref = jnp.maximum(
        jnp.maximum(jnp.maximum(x * 1.0, 0.0) * 1.0, 0.0) * 1.0, 0.0
    ).reshape(-1, 1)
    assert out.shape == (2 * 1 * 16 * 16, 1), out.shape
    assert jnp.allclose(out, ref), "mismatch vs reference (unit weights)"

    # Extra check with non-trivial (possibly negative) weights to confirm the
    # three-stage mul/ReLU chain semantics are preserved.
    k1, k2, k3 = jax.random.split(jax.random.PRNGKey(1), 3)
    w1r = jax.random.normal(k1, (1, 1, 1, 1), dtype=jnp.float32)
    w2r = jax.random.normal(k2, (1, 1, 1, 1), dtype=jnp.float32)
    w3r = jax.random.normal(k3, (1, 1, 1, 1), dtype=jnp.float32)
    out_r = jax.block_until_ready(debugnet5_forward(x, w1r, w2r, w3r))
    t = jnp.maximum(x * w1r.reshape(()), 0.0)
    t = jnp.maximum(t * w2r.reshape(()), 0.0)
    t = jnp.maximum(t * w3r.reshape(()), 0.0)
    ref_r = t.reshape(-1, 1)
    assert jnp.allclose(out_r, ref_r, atol=1e-6), "mismatch vs reference (random weights)"

    print("KERNEL_OK")
</pallas_src>

<mosaic_0001>
module attributes {stable_mosaic.version = 11 : i64} {
  func.func @_debugnet5_kernel(%arg0: i32, %arg1: memref<3xf32, #tpu.memory_space<smem>>, %arg2: memref<8x128xf32, #tpu.memory_space<vmem>>, %arg3: memref<8x128xf32, #tpu.memory_space<vmem>>) attributes {dimension_semantics = [#tpu.dimension_semantics<parallel>], iteration_bounds = array<i64: 1>, scalar_prefetch = 0 : i64, scratch_operands = 0 : i64, tpu.core_type = #tpu.core_type<tc>, window_params = [{transform_indices = @transform_0, window_bounds = array<i64: 3>}, {transform_indices = @transform_1, window_bounds = array<i64: 8, 128>}, {transform_indices = @transform_2, window_bounds = array<i64: 8, 128>}]} {
    %c0 = arith.constant 0 : index
    %c0_0 = arith.constant 0 : index
    %0 = vector.load %arg2[%c0, %c0_0] : memref<8x128xf32, #tpu.memory_space<vmem>>, vector<8x128xf32>
    %c0_1 = arith.constant 0 : index
    %1 = memref.load %arg1[%c0_1] : memref<3xf32, #tpu.memory_space<smem>>
    %c1 = arith.constant 1 : index
    %2 = memref.load %arg1[%c1] : memref<3xf32, #tpu.memory_space<smem>>
    %c2 = arith.constant 2 : index
    %3 = memref.load %arg1[%c2] : memref<3xf32, #tpu.memory_space<smem>>
    %4 = vector.broadcast %1 : f32 to vector<8x128xf32>
    %5 = arith.mulf %0, %4 : vector<8x128xf32>
    %cst = arith.constant 0.000000e+00 : f32
    %6 = vector.broadcast %cst : f32 to vector<8x128xf32>
    %7 = arith.maximumf %5, %6 : vector<8x128xf32>
    %8 = vector.broadcast %2 : f32 to vector<8x128xf32>
    %9 = arith.mulf %7, %8 : vector<8x128xf32>
    %cst_2 = arith.constant 0.000000e+00 : f32
    %10 = vector.broadcast %cst_2 : f32 to vector<8x128xf32>
    %11 = arith.maximumf %9, %10 : vector<8x128xf32>
    %12 = vector.broadcast %3 : f32 to vector<8x128xf32>
    %13 = arith.mulf %11, %12 : vector<8x128xf32>
    %cst_3 = arith.constant 0.000000e+00 : f32
    %14 = vector.broadcast %cst_3 : f32 to vector<8x128xf32>
    %15 = arith.maximumf %13, %14 : vector<8x128xf32>
    %c0_4 = arith.constant 0 : index
    %c0_5 = arith.constant 0 : index
    %16 = vector.load %arg3[%c0_4, %c0_5] : memref<8x128xf32, #tpu.memory_space<vmem>>, vector<8x128xf32>
    tpu.vector_store %arg3[%c0_4, %c0_5], %15 {strides = array<i32>} : memref<8x128xf32, #tpu.memory_space<vmem>>, vector<8x128xf32>,
    return
  }
  func.func @transform_0(%arg0: i32) -> i32 {
    %c0_i32 = arith.constant 0 : i32
    %c0_i32_0 = arith.constant 0 : i32
    return %c0_i32 : i32
  }
  func.func @transform_1(%arg0: i32) -> (i32, i32) {
    %c0_i32 = arith.constant 0 : i32
    %c0_i32_0 = arith.constant 0 : i32
    return %arg0, %c0_i32 : i32, i32
  }
  func.func @transform_2(%arg0: i32) -> (i32, i32) {
    %c0_i32 = arith.constant 0 : i32
    %c0_i32_0 = arith.constant 0 : i32
    return %arg0, %c0_i32 : i32, i32
  }
}

</mosaic_0001>

<llo_original>
// kernel: tpu_custom_call.1
$region0: #{tpu_custom_call.1}
  #allocation0 [shape = 'u32[]', space=smem, size = 0x4, offset = 0x4, fixed_abs, tag = 'smem constant byte address 0x4 - core index']
  #allocation1 [shape = 'u32[144,128]{1,0:T(1,128)}', space=vmem, size = 0x12000, scoped, tag = 'internal scratch']
  %s0 = inlined_call_operand.hbm [shape: f32[3], index: 0, kind: input, shape index: {}]
  %s1 = inlined_call_operand.hbm [shape: f32[8,128], index: 1, kind: input, shape index: {}]
  %s2 = inlined_call_operand.hbm [shape: f32[8,128], index: 2, kind: output, shape index: {}]
  %s3 = sld [smem:[#allocation0]]
  $region26: #{tpu_custom_call.1} parent=0
    _
  %s5 = ssub.s32 1, %s3
  %s6 = scalar_select 0, %s5, %s3
  $region1: #{tpu_custom_call.1} parent=0
    #allocation2 [shape = 'u8[512]{0}', space=smem, size = 0x200, scoped, tag = 'input window, operand 0, single buffered']
    #allocation3 [shape = 's32[1]{0}', space=sflag, size = 0x4, scoped, tag = 'scoped memory for tpu_custom_call.1']
    #allocation4 [shape = 's32[1]{0}', space=sflag, size = 0x4, scoped, tag = 'scoped memory for tpu_custom_call.1']
    #allocation5 [shape = 's32[1]{0}', space=sflag, size = 0x4, scoped, tag = 'scoped memory for tpu_custom_call.1']
    #allocation6 [shape = 'u8[4096]{0}', space=vmem, size = 0x1000, scoped, tag = 'input window, operand 1, single buffered']
    #allocation7 [shape = 'u8[4096]{0}', space=vmem, size = 0x1000, scoped, tag = 'output window, operand 0, single buffered']
    %7 = vsyncpa [#allocation5], 0
    %8 = vsyncpa [#allocation3], 0
    %9 = vsyncpa [#allocation4], 0
    // Predicated region
    $region2: #{tpu_custom_call.1} parent=1 // pred_check
      _
    $region3: #{tpu_custom_call.1} parent=1 // pred_check_branch
      %11 = sbr.rel (0) target = $region5
    $region4: #{tpu_custom_call.1} parent=1 // pred_region
      %s13 = ssub.s32 16, 16
      %14 = vsyncadd [#allocation5], %s13
      %17 = dma.hbm_to_smem %s0, 16, [#allocation2], [#allocation5]
    $region5: #{tpu_custom_call.1} parent=1 // pred_fallthru
      _
    // Predicated region
    $region6: #{tpu_custom_call.1} parent=1 // pred_check
      _
    $region7: #{tpu_custom_call.1} parent=1 // pred_check_branch
      %19 = sbr.rel (0) target = $region9
    $region8: #{tpu_custom_call.1} parent=1 // pred_region
      %s21 = ssub.s32 128, 128
      %22 = vsyncadd [#allocation3], %s21
      %s24 = sshll.u32 [#allocation6], 4
      %s25 = int_to_ptr.vmem [resolvable:$true] %s24
      %27 = dma.hbm_to_vmem [thread:$0]  %s1, 128, %s25, [#allocation3]
    $region9: #{tpu_custom_call.1} parent=1 // pred_fallthru
      _
    // Predicated region
    $region10: #{tpu_custom_call.1} parent=1 // pred_check
      _
    $region11: #{tpu_custom_call.1} parent=1 // pred_check_branch
      %29 = sbr.rel (0) target = $region13
    $region12: #{tpu_custom_call.1} parent=1 // pred_region
      %30 = dma.done [#allocation5], 16
    $region13: #{tpu_custom_call.1} parent=1 // pred_fallthru
      _
    // Predicated region
    $region14: #{tpu_custom_call.1} parent=1 // pred_check
      _
    $region15: #{tpu_custom_call.1} parent=1 // pred_check_branch
      %32 = sbr.rel (0) target = $region17
    $region16: #{tpu_custom_call.1} parent=1 // pred_region
      %33 = dma.done [#allocation3], 128
    $region17: #{tpu_custom_call.1} parent=1 // pred_fallthru
      _
    %34 = sfence
    %v35 = vld [vmem:[#allocation6] sm:$0xff]
    %s36 = sld [smem:[#allocation2]]
    %s37 = sld [smem:[#allocation2 + $0x1]]
    %s38 = sld [smem:[#allocation2 + $0x2]]
    %v39 = vstv %s36
    %v40 = vmul.f32 %v35, %v39
    %v41 = vmax.f32 %v40, 0.0
    %v42 = vstv %s37
    %v43 = vmul.f32 %v41, %v42
    %v44 = vmax.f32 %v43, 0.0
    %v45 = vstv %s38
    %v46 = vmul.f32 %v44, %v45
    %v47 = vmax.f32 %v46, 0.0
    %48 = vst [vmem:[#allocation7] sm:$0xff] %v47
    // Predicated region
    $region18: #{tpu_custom_call.1} parent=1 // pred_check
      _
    $region19: #{tpu_custom_call.1} parent=1 // pred_check_branch
      %50 = sbr.rel (0) target = $region21
    $region20: #{tpu_custom_call.1} parent=1 // pred_region
      %s52 = ssub.s32 128, 128
      %53 = vsyncadd [#allocation4], %s52
      %s55 = sshll.u32 [#allocation7], 4
      %s56 = int_to_ptr.vmem [resolvable:$true] %s55
      %58 = dma.vmem_to_hbm [thread:$0]  %s56, 128, %s2, [#allocation4]
    $region21: #{tpu_custom_call.1} parent=1 // pred_fallthru
      _
    // Predicated region
    $region22: #{tpu_custom_call.1} parent=1 // pred_check
      _
    $region23: #{tpu_custom_call.1} parent=1 // pred_check_branch
      %60 = sbr.rel (0) target = $region25
    $region24: #{tpu_custom_call.1} parent=1 // pred_region
      %61 = dma.done [#allocation4], 128
    $region25: #{tpu_custom_call.1} parent=1 // pred_fallthru
      _
    %62 = vsyncpa [#allocation3], 1
    %63 = vsyncpa [#allocation4], 1
    %64 = vsyncpa [#allocation5], 1

</llo_original>
